<compile_context>
chip_gen: v5e
topology: v5e:2x2
jax: 0.10.0
libtpu: 0.0.40
codegen_flags: <defaults>
</compile_context>

<pallas_src>
import jax
import jax.numpy as jnp
from jax.experimental import pallas as pl
from jax.experimental.pallas import tpu as pltpu


def _round_up(x, m):
    return (x + m - 1) // m * m


def _pick_tn(n):
    for cand in (512, 256, 128):
        if n % cand == 0:
            return cand
    return n                       # last dim equals the full array dim


def _pick_tb(b):
    return min(256, _round_up(b, 8))


def _pick_tk(k):
    if k <= 512:
        return k                   # block dim equals the full array dim
    for cand in (512, 256, 128):
        if k % cand == 0:
            return cand
    return k


# --------------------------------------------------------------------------
# Single-timestep kernel (matches LIF.forward exactly).
# Grid: (B tiles, N tiles, K tiles) — K is the innermost "arbitrary" axis,
# accumulated into a VMEM scratch; the LIF update runs on the last K step.
# --------------------------------------------------------------------------
def lif_step_kernel(z_ref, w_ref, p_ref, sz_ref, sv_ref, si_ref,
                    zo_ref, vo_ref, io_ref, acc_ref):
    k = pl.program_id(2)

    @pl.when(k == 0)
    def _():
        acc_ref[...] = jnp.zeros_like(acc_ref)

    acc_ref[...] += jnp.dot(z_ref[...], w_ref[...],
                            preferred_element_type=jnp.float32)

    @pl.when(k == pl.num_programs(2) - 1)
    def _():
        p = p_ref[...]                              # (4, tn)
        bias, idec, vdec, thr = p[0:1], p[1:2], p[2:3], p[3:4]
        syn = acc_ref[...] + bias
        i = si_ref[...] * idec + syn
        v = sv_ref[...] * vdec * (1.0 - sz_ref[...]) + i
        zo_ref[...] = (v > thr).astype(jnp.float32)
        vo_ref[...] = v
        io_ref[...] = i


@jax.jit
def lif_forward(z, weight, bias, i_decay, v_decay, thresh, state=None):
    """Returns (z_out, (z_out, v, i)) — same semantics as LIF.forward."""
    B, K = z.shape
    N = weight.shape[1]
    if state is None:
        zeros = jnp.zeros((B, N), jnp.float32)
        state = (zeros, zeros, zeros)
    sz, sv, si = state

    tb = _pick_tb(B)
    tn = _pick_tn(N)
    tk = _pick_tk(K)
    Bp = _round_up(B, tb)
    pad = Bp - B
    if pad:
        z = jnp.pad(z, ((0, pad), (0, 0)))
        sz = jnp.pad(sz, ((0, pad), (0, 0)))
        sv = jnp.pad(sv, ((0, pad), (0, 0)))
        si = jnp.pad(si, ((0, pad), (0, 0)))

    params = jnp.stack([bias, i_decay, v_decay, thresh], axis=0)   # (4, N)

    grid = (Bp // tb, N // tn, K // tk)
    z_spec = pl.BlockSpec((tb, tk), lambda ib, jn, kk: (ib, kk))
    w_spec = pl.BlockSpec((tk, tn), lambda ib, jn, kk: (kk, jn))
    p_spec = pl.BlockSpec((4, tn), lambda ib, jn, kk: (0, jn))
    st_spec = pl.BlockSpec((tb, tn), lambda ib, jn, kk: (ib, jn))

    out_shape = [jax.ShapeDtypeStruct((Bp, N), jnp.float32)] * 3

    zo, vo, io = pl.pallas_call(
        lif_step_kernel,
        out_shape=out_shape,
        grid_spec=pltpu.PrefetchScalarGridSpec(
            num_scalar_prefetch=0,
            grid=grid,
            in_specs=[z_spec, w_spec, p_spec, st_spec, st_spec, st_spec],
            out_specs=[st_spec, st_spec, st_spec],
            scratch_shapes=[pltpu.VMEM((tb, tn), jnp.float32)],
        ),
        # state.(z, v, i) -> out.(z, v, i): reuse HBM buffers when donatable.
        input_output_aliases={3: 0, 4: 1, 5: 2},
        compiler_params=pltpu.CompilerParams(
            dimension_semantics=("parallel", "parallel", "arbitrary")),
    )(z, weight, params, sz, sv, si)

    if pad:
        zo, vo, io = zo[:B], vo[:B], io[:B]
    return zo, (zo, vo, io)


# --------------------------------------------------------------------------
# Fused multi-timestep kernel: the recurrent state lives in VMEM-resident
# output blocks across the (last, "arbitrary") T grid axis — no HBM
# round-trip of the [B, N] state per timestep. The (K, tn) weight block also
# stays VMEM-resident across T (deliberately no K tiling here: tiling K with
# T innermost would re-stream the weight every timestep).
# --------------------------------------------------------------------------
def lif_seq_kernel(z_ref, w_ref, p_ref, sz0_ref, sv0_ref, si0_ref,
                   zs_ref, zf_ref, vf_ref, if_ref):
    t = pl.program_id(2)

    @pl.when(t == 0)
    def _():
        zf_ref[...] = sz0_ref[...]
        vf_ref[...] = sv0_ref[...]
        if_ref[...] = si0_ref[...]

    p = p_ref[...]                              # (4, tn)
    bias, idec, vdec, thr = p[0:1], p[1:2], p[2:3], p[3:4]

    syn = jnp.dot(z_ref[...], w_ref[...],
                  preferred_element_type=jnp.float32) + bias
    i = if_ref[...] * idec + syn
    v = vf_ref[...] * vdec * (1.0 - zf_ref[...]) + i
    z = (v > thr).astype(jnp.float32)

    zs_ref[...] = z          # spike train out for this timestep
    zf_ref[...] = z          # carried state (VMEM-resident across t)
    vf_ref[...] = v
    if_ref[...] = i


@jax.jit
def lif_forward_seq(z_seq, weight, bias, i_decay, v_decay, thresh, state=None):
    """Applies LIF.forward over T timesteps. Returns (spikes[T,B,N], final_state)."""
    T, B, K = z_seq.shape
    N = weight.shape[1]
    if state is None:
        zeros = jnp.zeros((B, N), jnp.float32)
        state = (zeros, zeros, zeros)
    sz, sv, si = state

    tb = _pick_tb(B)
    tn = _pick_tn(N)
    Bp = _round_up(B, tb)
    pad = Bp - B
    if pad:
        z_seq = jnp.pad(z_seq, ((0, 0), (0, pad), (0, 0)))
        sz = jnp.pad(sz, ((0, pad), (0, 0)))
        sv = jnp.pad(sv, ((0, pad), (0, 0)))
        si = jnp.pad(si, ((0, pad), (0, 0)))

    params = jnp.stack([bias, i_decay, v_decay, thresh], axis=0)   # (4, N)

    grid = (Bp // tb, N // tn, T)
    zin_spec = pl.BlockSpec((None, tb, K), lambda ib, jn, t: (t, ib, 0))
    w_spec = pl.BlockSpec((K, tn), lambda ib, jn, t: (0, jn))
    p_spec = pl.BlockSpec((4, tn), lambda ib, jn, t: (0, jn))
    st_spec = pl.BlockSpec((tb, tn), lambda ib, jn, t: (ib, jn))
    zout_spec = pl.BlockSpec((None, tb, tn), lambda ib, jn, t: (t, ib, jn))

    out_shape = (jax.ShapeDtypeStruct((T, Bp, N), jnp.float32),
                 jax.ShapeDtypeStruct((Bp, N), jnp.float32),
                 jax.ShapeDtypeStruct((Bp, N), jnp.float32),
                 jax.ShapeDtypeStruct((Bp, N), jnp.float32))

    zs, zf, vf, if_ = pl.pallas_call(
        lif_seq_kernel,
        out_shape=out_shape,
        grid_spec=pltpu.PrefetchScalarGridSpec(
            num_scalar_prefetch=0,
            grid=grid,
            in_specs=[zin_spec, w_spec, p_spec, st_spec, st_spec, st_spec],
            out_specs=[zout_spec, st_spec, st_spec, st_spec],
        ),
        # initial state -> final state: reuse HBM buffers when donatable.
        input_output_aliases={3: 1, 4: 2, 5: 3},
        compiler_params=pltpu.CompilerParams(
            dimension_semantics=("parallel", "parallel", "arbitrary")),
    )(z_seq, weight, params, sz, sv, si)

    if pad:
        zs, zf, vf, if_ = zs[:, :B], zf[:B], vf[:B], if_[:B]
    return zs, (zf, vf, if_)


# --------------------------------------------------------------------------
# Plain-JAX reference (mirrors the PyTorch module).
# --------------------------------------------------------------------------
def lif_reference(z, weight, bias, i_decay, v_decay, thresh, state=None):
    B = z.shape[0]
    N = weight.shape[1]
    if state is None:
        zeros = jnp.zeros((B, N), jnp.float32)
        state = (zeros, zeros, zeros)
    sz, sv, si = state
    syn = z @ weight + bias
    i = si * i_decay + syn
    v = sv * v_decay * (1.0 - sz) + i
    zo = (v > thresh).astype(jnp.float32)
    return zo, (zo, v, i)


if __name__ == "__main__":
    # TODO(synk): SpikeFunction's rectangular surrogate gradient (backward) is
    # not implemented; this script covers the forward pass only.
    key = jax.random.PRNGKey(0)
    B, K, N, T = 8, 32, 128, 4     # batch, synapse in-features, LIF size, timesteps

    k = jax.random.split(key, 12)
    z_in = jax.random.normal(k[0], (B, K), jnp.float32)
    weight = jax.random.normal(k[1], (K, N), jnp.float32) * 0.1
    bias = jax.random.normal(k[2], (N,), jnp.float32) * 0.1
    # torch.rand -> uniform [0, 1)
    i_decay = jax.random.uniform(k[3], (N,), jnp.float32)
    v_decay = jax.random.uniform(k[4], (N,), jnp.float32)
    thresh = jax.random.uniform(k[5], (N,), jnp.float32)
    prev_state = (
        (jax.random.uniform(k[6], (B, N)) > 0.5).astype(jnp.float32),
        jax.random.normal(k[7], (B, N), jnp.float32),
        jax.random.normal(k[8], (B, N), jnp.float32),
    )

    # --- single step: zero state and carried state ---
    zo0, st0 = lif_forward(z_in, weight, bias, i_decay, v_decay, thresh, None)
    zo1, st1 = lif_forward(z_in, weight, bias, i_decay, v_decay, thresh, prev_state)
    jax.block_until_ready((zo0, st0, zo1, st1))

    rz0, rs0 = lif_reference(z_in, weight, bias, i_decay, v_decay, thresh, None)
    rz1, rs1 = lif_reference(z_in, weight, bias, i_decay, v_decay, thresh, prev_state)
    for a, b in zip((zo0, *st0, zo1, *st1), (rz0, *rs0, rz1, *rs1)):
        assert jnp.allclose(a, b, atol=1e-5, rtol=1e-5), "single-step mismatch"

    # --- single step: batch not a multiple of the row tile (padding path) ---
    B2 = 10
    z2 = jax.random.normal(k[9], (B2, K), jnp.float32)
    zo2, st2 = lif_forward(z2, weight, bias, i_decay, v_decay, thresh, None)
    jax.block_until_ready((zo2, st2))
    rz2, rs2 = lif_reference(z2, weight, bias, i_decay, v_decay, thresh, None)
    for a, b in zip((zo2, *st2), (rz2, *rs2)):
        assert jnp.allclose(a, b, atol=1e-5, rtol=1e-5), "padded-batch mismatch"

    # --- single step: large K exercising the K-tiled accumulator path ---
    K2 = 1024                      # tk=512 -> 2 accumulation steps
    w2 = jax.random.normal(k[10], (K2, N), jnp.float32) * 0.03
    z3 = jax.random.normal(k[11], (B, K2), jnp.float32)
    zo3, st3 = lif_forward(z3, w2, bias, i_decay, v_decay, thresh, prev_state)
    jax.block_until_ready((zo3, st3))
    rz3, rs3 = lif_reference(z3, w2, bias, i_decay, v_decay, thresh, prev_state)
    assert jnp.allclose(st3[1], rs3[1], atol=1e-3, rtol=1e-3), "K-tiled v mismatch"
    assert jnp.allclose(st3[2], rs3[2], atol=1e-3, rtol=1e-3), "K-tiled i mismatch"
    # Spikes: compare only where v is clearly away from the threshold (the
    # reference matmul and the MXU accumulation may differ in the last ulps).
    safe = jnp.abs(rs3[1] - thresh[None, :]) > 1e-3
    assert jnp.all(jnp.where(safe, zo3 == rz3, True)), "K-tiled spike mismatch"

    # --- fused multi-timestep recurrence (state stays in VMEM) ---
    z_seq = (jax.random.uniform(key, (T, B, K)) > 0.5).astype(jnp.float32)
    zs, stT = lif_forward_seq(z_seq, weight, bias, i_decay, v_decay, thresh,
                              prev_state)
    jax.block_until_ready((zs, stT))

    st_ref = prev_state
    for t in range(T):
        zr, st_ref = lif_reference(z_seq[t], weight, bias, i_decay, v_decay,
                                   thresh, st_ref)
        assert jnp.allclose(zs[t], zr, atol=1e-4, rtol=1e-4), "seq spike mismatch"
    for a, b in zip(stT, st_ref):
        assert jnp.allclose(a, b, atol=1e-4, rtol=1e-4), "seq state mismatch"

    print("KERNEL_OK")
</pallas_src>

<mosaic_0001>
module attributes {stable_mosaic.version = 11 : i64} {
  func.func @lif_step_kernel(%arg0: i32, %arg1: i32, %arg2: i32, %arg3: memref<8x32xf32, #tpu.memory_space<vmem>>, %arg4: memref<32x128xf32, #tpu.memory_space<vmem>>, %arg5: memref<4x128xf32, #tpu.memory_space<vmem>>, %arg6: memref<8x128xf32, #tpu.memory_space<vmem>>, %arg7: memref<8x128xf32, #tpu.memory_space<vmem>>, %arg8: memref<8x128xf32, #tpu.memory_space<vmem>>, %arg9: memref<8x128xf32, #tpu.memory_space<vmem>>, %arg10: memref<8x128xf32, #tpu.memory_space<vmem>>, %arg11: memref<8x128xf32, #tpu.memory_space<vmem>>, %arg12: memref<8x128xf32, #tpu.memory_space<vmem>>) attributes {dimension_semantics = [#tpu.dimension_semantics<parallel>, #tpu.dimension_semantics<parallel>, #tpu.dimension_semantics<arbitrary>], iteration_bounds = array<i64: 1, 1, 1>, scalar_prefetch = 0 : i64, scratch_operands = 1 : i64, tpu.core_type = #tpu.core_type<tc>, window_params = [{transform_indices = @transform_0, window_bounds = array<i64: 8, 32>}, {transform_indices = @transform_1, window_bounds = array<i64: 32, 128>}, {transform_indices = @transform_2, window_bounds = array<i64: 4, 128>}, {transform_indices = @transform_3, window_bounds = array<i64: 8, 128>}, {transform_indices = @transform_4, window_bounds = array<i64: 8, 128>}, {transform_indices = @transform_5, window_bounds = array<i64: 8, 128>}, {transform_indices = @transform_6, window_bounds = array<i64: 8, 128>}, {transform_indices = @transform_7, window_bounds = array<i64: 8, 128>}, {transform_indices = @transform_8, window_bounds = array<i64: 8, 128>}]} {
    %c0_i32 = arith.constant 0 : i32
    %0 = arith.cmpi eq, %arg2, %c0_i32 : i32
    %1 = arith.extui %0 : i1 to i32
    %c0_i32_0 = arith.constant 0 : i32
    %2 = arith.cmpi ne, %1, %c0_i32_0 : i32
    scf.if %2 {
      %cst_10 = arith.constant 0.000000e+00 : f32
      %12 = vector.broadcast %cst_10 : f32 to vector<8x128xf32>
      %c0_11 = arith.constant 0 : index
      %c0_12 = arith.constant 0 : index
      %13 = vector.load %arg12[%c0_11, %c0_12] : memref<8x128xf32, #tpu.memory_space<vmem>>, vector<8x128xf32>
      tpu.vector_store %arg12[%c0_11, %c0_12], %12 {strides = array<i32>} : memref<8x128xf32, #tpu.memory_space<vmem>>, vector<8x128xf32>,
    } else {
    }
    %c0 = arith.constant 0 : index
    %c0_1 = arith.constant 0 : index
    %3 = vector.load %arg12[%c0, %c0_1] : memref<8x128xf32, #tpu.memory_space<vmem>>, vector<8x128xf32>
    %c0_2 = arith.constant 0 : index
    %c0_3 = arith.constant 0 : index
    %4 = vector.load %arg3[%c0_2, %c0_3] : memref<8x32xf32, #tpu.memory_space<vmem>>, vector<8x32xf32>
    %c0_4 = arith.constant 0 : index
    %c0_5 = arith.constant 0 : index
    %5 = vector.load %arg4[%c0_4, %c0_5] : memref<32x128xf32, #tpu.memory_space<vmem>>, vector<32x128xf32>
    %cst = arith.constant dense<0.000000e+00> : vector<8x128xf32>
    %6 = tpu.matmul %4, %5, %cst {dimension_numbers = #tpu.dot_dimension_numbers<[1], [0], [0], [1], [0, 0, 1, 1], [], []>} : vector<8x32xf32>, vector<32x128xf32>, vector<8x128xf32> -> vector<8x128xf32>
    %7 = arith.addf %3, %6 : vector<8x128xf32>
    %c0_6 = arith.constant 0 : index
    %c0_7 = arith.constant 0 : index
    %8 = vector.load %arg12[%c0_6, %c0_7] : memref<8x128xf32, #tpu.memory_space<vmem>>, vector<8x128xf32>
    tpu.vector_store %arg12[%c0_6, %c0_7], %7 {strides = array<i32>} : memref<8x128xf32, #tpu.memory_space<vmem>>, vector<8x128xf32>,
    %c0_i32_8 = arith.constant 0 : i32
    %9 = arith.cmpi eq, %arg2, %c0_i32_8 : i32
    %10 = arith.extui %9 : i1 to i32
    %c0_i32_9 = arith.constant 0 : i32
    %11 = arith.cmpi ne, %10, %c0_i32_9 : i32
    scf.if %11 {
      %c0_10 = arith.constant 0 : index
      %c0_11 = arith.constant 0 : index
      %12 = vector.load %arg5[%c0_10, %c0_11] : memref<4x128xf32, #tpu.memory_space<vmem>>, vector<4x128xf32>
      %13 = vector.extract_strided_slice %12 {offsets = [0, 0], sizes = [1, 128], strides = [1, 1]} : vector<4x128xf32> to vector<1x128xf32>
      %14 = vector.extract_strided_slice %12 {offsets = [1, 0], sizes = [1, 128], strides = [1, 1]} : vector<4x128xf32> to vector<1x128xf32>
      %15 = vector.extract_strided_slice %12 {offsets = [2, 0], sizes = [1, 128], strides = [1, 1]} : vector<4x128xf32> to vector<1x128xf32>
      %16 = vector.extract_strided_slice %12 {offsets = [3, 0], sizes = [1, 128], strides = [1, 1]} : vector<4x128xf32> to vector<1x128xf32>
      %c0_12 = arith.constant 0 : index
      %c0_13 = arith.constant 0 : index
      %17 = vector.load %arg12[%c0_12, %c0_13] : memref<8x128xf32, #tpu.memory_space<vmem>>, vector<8x128xf32>
      %18 = vector.broadcast %13 : vector<1x128xf32> to vector<8x128xf32>
      %19 = arith.addf %17, %18 : vector<8x128xf32>
      %c0_14 = arith.constant 0 : index
      %c0_15 = arith.constant 0 : index
      %20 = vector.load %arg8[%c0_14, %c0_15] : memref<8x128xf32, #tpu.memory_space<vmem>>, vector<8x128xf32>
      %21 = vector.broadcast %14 : vector<1x128xf32> to vector<8x128xf32>
      %22 = arith.mulf %20, %21 : vector<8x128xf32>
      %23 = arith.addf %22, %19 : vector<8x128xf32>
      %c0_16 = arith.constant 0 : index
      %c0_17 = arith.constant 0 : index
      %24 = vector.load %arg7[%c0_16, %c0_17] : memref<8x128xf32, #tpu.memory_space<vmem>>, vector<8x128xf32>
      %25 = vector.broadcast %15 : vector<1x128xf32> to vector<8x128xf32>
      %26 = arith.mulf %24, %25 : vector<8x128xf32>
      %c0_18 = arith.constant 0 : index
      %c0_19 = arith.constant 0 : index
      %27 = vector.load %arg6[%c0_18, %c0_19] : memref<8x128xf32, #tpu.memory_space<vmem>>, vector<8x128xf32>
      %cst_20 = arith.constant 1.000000e+00 : f32
      %28 = vector.broadcast %cst_20 : f32 to vector<8x128xf32>
      %29 = arith.subf %28, %27 : vector<8x128xf32>
      %30 = arith.mulf %26, %29 : vector<8x128xf32>
      %31 = arith.addf %30, %23 : vector<8x128xf32>
      %32 = vector.broadcast %16 : vector<1x128xf32> to vector<8x128xf32>
      %33 = arith.cmpf ogt, %31, %32 : vector<8x128xf32>
      %34 = arith.extui %33 : vector<8x128xi1> to vector<8x128xi32>
      %35 = arith.sitofp %34 : vector<8x128xi32> to vector<8x128xf32>
      %c0_21 = arith.constant 0 : index
      %c0_22 = arith.constant 0 : index
      %36 = vector.load %arg9[%c0_21, %c0_22] : memref<8x128xf32, #tpu.memory_space<vmem>>, vector<8x128xf32>
      tpu.vector_store %arg9[%c0_21, %c0_22], %35 {strides = array<i32>} : memref<8x128xf32, #tpu.memory_space<vmem>>, vector<8x128xf32>,
      %c0_23 = arith.constant 0 : index
      %c0_24 = arith.constant 0 : index
      %37 = vector.load %arg10[%c0_23, %c0_24] : memref<8x128xf32, #tpu.memory_space<vmem>>, vector<8x128xf32>
      tpu.vector_store %arg10[%c0_23, %c0_24], %31 {strides = array<i32>} : memref<8x128xf32, #tpu.memory_space<vmem>>, vector<8x128xf32>,
      %c0_25 = arith.constant 0 : index
      %c0_26 = arith.constant 0 : index
      %38 = vector.load %arg11[%c0_25, %c0_26] : memref<8x128xf32, #tpu.memory_space<vmem>>, vector<8x128xf32>
      tpu.vector_store %arg11[%c0_25, %c0_26], %23 {strides = array<i32>} : memref<8x128xf32, #tpu.memory_space<vmem>>, vector<8x128xf32>,
    } else {
    }
    return
  }
  func.func @transform_0(%arg0: i32, %arg1: i32, %arg2: i32) -> (i32, i32) {
    %c0_i32 = arith.constant 0 : i32
    return %arg0, %arg2 : i32, i32
  }
  func.func @transform_1(%arg0: i32, %arg1: i32, %arg2: i32) -> (i32, i32) {
    %c0_i32 = arith.constant 0 : i32
    return %arg2, %arg1 : i32, i32
  }
  func.func @transform_2(%arg0: i32, %arg1: i32, %arg2: i32) -> (i32, i32) {
    %c0_i32 = arith.constant 0 : i32
    %c0_i32_0 = arith.constant 0 : i32
    return %c0_i32, %arg1 : i32, i32
  }
  func.func @transform_3(%arg0: i32, %arg1: i32, %arg2: i32) -> (i32, i32) {
    %c0_i32 = arith.constant 0 : i32
    return %arg0, %arg1 : i32, i32
  }
  func.func @transform_4(%arg0: i32, %arg1: i32, %arg2: i32) -> (i32, i32) {
    %c0_i32 = arith.constant 0 : i32
    return %arg0, %arg1 : i32, i32
  }
  func.func @transform_5(%arg0: i32, %arg1: i32, %arg2: i32) -> (i32, i32) {
    %c0_i32 = arith.constant 0 : i32
    return %arg0, %arg1 : i32, i32
  }
  func.func @transform_6(%arg0: i32, %arg1: i32, %arg2: i32) -> (i32, i32) {
    %c0_i32 = arith.constant 0 : i32
    return %arg0, %arg1 : i32, i32
  }
  func.func @transform_7(%arg0: i32, %arg1: i32, %arg2: i32) -> (i32, i32) {
    %c0_i32 = arith.constant 0 : i32
    return %arg0, %arg1 : i32, i32
  }
  func.func @transform_8(%arg0: i32, %arg1: i32, %arg2: i32) -> (i32, i32) {
    %c0_i32 = arith.constant 0 : i32
    return %arg0, %arg1 : i32, i32
  }
}

</mosaic_0001>

<llo_original>
// kernel: lif_forward.1
$region0: #{lif_forward.1}
  #allocation0 [shape = 'u32[]', space=smem, size = 0x4, offset = 0x4, fixed_abs, tag = 'smem constant byte address 0x4 - core index']
  #allocation1 [shape = 'u32[72,128]{1,0:T(1,128)}', space=vmem, size = 0x9000, scoped, tag = 'internal scratch']
  #allocation2 [shape = 'f32[8,128]{1,0:T(8,128)}', space=vmem, size = 0x1000, scoped, tag = 'scratch operand']
  %s0 = inlined_call_operand.hbm [shape: f32[8,32], index: 0, kind: input, shape index: {}]
  %s1 = inlined_call_operand.vmem [shape: f32[32,128], index: 1, kind: input, shape index: {}]
  %s2 = inlined_call_operand.vmem [shape: f32[4,128], index: 2, kind: input, shape index: {}]
  %s3 = inlined_call_operand.vmem [shape: f32[8,128], index: 3, kind: input, shape index: {}, may-alias: {3,6}]
  %s4 = inlined_call_operand.vmem [shape: f32[8,128], index: 4, kind: input, shape index: {}, may-alias: {4,7}]
  %s5 = inlined_call_operand.vmem [shape: f32[8,128], index: 5, kind: input, shape index: {}, may-alias: {5,8}]
  %s6 = inlined_call_operand.vmem [shape: f32[8,128], index: 6, kind: output, shape index: {0}, may-alias: {3,6}]
  %s7 = inlined_call_operand.vmem [shape: f32[8,128], index: 7, kind: output, shape index: {1}, may-alias: {4,7}]
  %s8 = inlined_call_operand.vmem [shape: f32[8,128], index: 8, kind: output, shape index: {2}, may-alias: {5,8}]
  %9 = xla_tuple %s6, %s7, %s8
  %s10 = sld [smem:[#allocation0]]
  $region62: #{lif_forward.1} parent=0
    _
  %s12 = ssub.s32 1, %s10
  %s13 = scalar_select 0, %s12, %s10
  $region1: #{lif_forward.1} parent=0
    #allocation3 [shape = 'u8[4096]{0}', space=vmem, size = 0x1000, scoped, tag = 'input window, operand 0, single buffered']
    #allocation4 [shape = 's32[1]{0}', space=sflag, size = 0x4, scoped, tag = 'scoped memory for lif_forward.1']
    %14 = vsyncpa [#allocation4], 0
    // Predicated region
    $region2: #{lif_forward.1} parent=1 // pred_check
      _
    $region3: #{lif_forward.1} parent=1 // pred_check_branch
      %16 = sbr.rel (0) target = $region5
    $region4: #{lif_forward.1} parent=1 // pred_region
      %18 = vsyncadd [#allocation4], 0
      %s20 = sshll.u32 %s0, 4
      %s21 = int_to_ptr.hbm [resolvable:$true] %s20
      %s22 = sshll.u32 [#allocation3], 4
      %s23 = int_to_ptr.vmem [resolvable:$true] %s22
      %25 = dma.hbm_to_vmem [thread:$0]  %s21, 128, %s23, [#allocation4]
    $region5: #{lif_forward.1} parent=1 // pred_fallthru
      _
    // Predicated region
    $region6: #{lif_forward.1} parent=1 // pred_check
      _
    $region7: #{lif_forward.1} parent=1 // pred_check_branch
      %27 = sbr.rel (0) target = $region9
    $region8: #{lif_forward.1} parent=1 // pred_region
      _
    $region9: #{lif_forward.1} parent=1 // pred_fallthru
      _
    // Predicated region
    $region10: #{lif_forward.1} parent=1 // pred_check
      _
    $region11: #{lif_forward.1} parent=1 // pred_check_branch
      %29 = sbr.rel (0) target = $region13
    $region12: #{lif_forward.1} parent=1 // pred_region
      _
    $region13: #{lif_forward.1} parent=1 // pred_fallthru
      _
    // Predicated region
    $region14: #{lif_forward.1} parent=1 // pred_check
      _
    $region15: #{lif_forward.1} parent=1 // pred_check_branch
      %31 = sbr.rel (0) target = $region17
    $region16: #{lif_forward.1} parent=1 // pred_region
      _
    $region17: #{lif_forward.1} parent=1 // pred_fallthru
      _
    // Predicated region
    $region18: #{lif_forward.1} parent=1 // pred_check
      _
    $region19: #{lif_forward.1} parent=1 // pred_check_branch
      %33 = sbr.rel (0) target = $region21
    $region20: #{lif_forward.1} parent=1 // pred_region
      _
    $region21: #{lif_forward.1} parent=1 // pred_fallthru
      _
    // Predicated region
    $region22: #{lif_forward.1} parent=1 // pred_check
      _
    $region23: #{lif_forward.1} parent=1 // pred_check_branch
      %35 = sbr.rel (0) target = $region25
    $region24: #{lif_forward.1} parent=1 // pred_region
      _
    $region25: #{lif_forward.1} parent=1 // pred_fallthru
      _
    // Predicated region
    $region26: #{lif_forward.1} parent=1 // pred_check
      _
    $region27: #{lif_forward.1} parent=1 // pred_check_branch
      %37 = sbr.rel (0) target = $region29
    $region28: #{lif_forward.1} parent=1 // pred_region
      %39 = dma.done [#allocation4], 128
    $region29: #{lif_forward.1} parent=1 // pred_fallthru
      _
    %p40 = scmp.eq.s32.totalorder 0, 0
    // Predicated region
    $region30: #{lif_forward.1} parent=1 // pred_check
      %p41 = pneg %p40
    $region31: #{lif_forward.1} parent=1 // pred_check_branch
      %43 = sbr.rel (%p41) target = $region33
    $region32: #{lif_forward.1} parent=1 // pred_region
      %44 = vst [vmem:[#allocation2] sm:$0xff] 0.0
    $region33: #{lif_forward.1} parent=1 // pred_fallthru
      _
    %v45 = vld [vmem:[#allocation2] sm:$0xff]
    %v46 = vld [vmem:[#allocation3] sm:$0xff]
    %v47 = vld [vmem:[%s1] sm:$0xff]
    %v48 = vld [vmem:[%s1 + $0x8] sm:$0xff]
    %v49 = vld [vmem:[%s1 + $0x10] sm:$0xff]
    %v50 = vld [vmem:[%s1 + $0x18] sm:$0xff]
    %vm51 = vcmask 261120
    %v53 = vsel %vm51, %v46, 0
    %55 = vmatpush.msra.mxu0 0.0
    %56 = vmatpush.msra.mxu0 0.0
    %57 = vmatpush.msra.mxu0 0.0
    %58 = vmatpush.msra.mxu0 0.0
    %59 = vmatpush.msra.mxu0 0.0
    %60 = vmatpush.msra.mxu0 0.0
    %61 = vmatpush.msra.mxu0 0.0
    %62 = vmatpush.msra.mxu0 0.0
    %63 = vmatpush.msra.mxu0 0.0
    %64 = vmatpush.msra.mxu0 0.0
    %65 = vmatpush.msra.mxu0 0.0
    %66 = vmatpush.msra.mxu0 0.0
    %67 = vmatpush.msra.mxu0 %v50
    %68 = vmatpush.msra.mxu0 %v49
    %69 = vmatpush.msra.mxu0 %v48
    %70 = vmatpush.msra.mxu0 %v47
    %71 = vmatmul.f32.gmra.mxu0 %v53
    %v72 = vpop.f32.mrf.mxu0
    %v73 = vadd.f32 0.0, %v72
    %74 = vdwg.mxu0
    %v75 = vadd.f32 %v45, %v73
    %76 = vst [vmem:[#allocation2] sm:$0xff] %v75
    // Predicated region
    $region34: #{lif_forward.1} parent=1 // pred_check
      %p77 = pneg %p40
    $region35: #{lif_forward.1} parent=1 // pred_check_branch
      %79 = sbr.rel (%p77) target = $region37
    $region36: #{lif_forward.1} parent=1 // pred_region
      %v80 = vld [vmem:[%s2] sm:$0xf]
      %v81 = vld [vmem:[#allocation2] sm:$0xff]
      %v82 = vperm.slane %v80, 0
      %v83 = vadd.f32 %v81, %v82
      %v84 = vld [vmem:[%s5] sm:$0xff]
      %v85 = vperm.slane %v80, 1
      %v86 = vmul.f32 %v84, %v85
      %v87 = vadd.f32 %v86, %v83
      %v88 = vld [vmem:[%s4] sm:$0xff]
      %v89 = vperm.slane %v80, 2
      %v90 = vmul.f32 %v88, %v89
      %v91 = vld [vmem:[%s3] sm:$0xff]
      %v92 = vsub.f32 1.0, %v91
      %v93 = vmul.f32 %v90, %v92
      %v94 = vadd.f32 %v93, %v87
      %v95 = vperm.slane %v80, 3
      %vm96 = vcmp.gt.f32.partialorder %v94, %v95
      %v97 = vsel %vm96, 1, 0
      %v98 = vcvt.s32.f32 %v97
      %99 = vst [vmem:[%s6] sm:$0xff] %v98
      %100 = vst [vmem:[%s7] sm:$0xff] %v94
      %101 = vst [vmem:[%s8] sm:$0xff] %v87
    $region37: #{lif_forward.1} parent=1 // pred_fallthru
      _
    // Predicated region
    $region38: #{lif_forward.1} parent=1 // pred_check
      _
    $region39: #{lif_forward.1} parent=1 // pred_check_branch
      %103 = sbr.rel (0) target = $region41
    $region40: #{lif_forward.1} parent=1 // pred_region
      _
    $region41: #{lif_forward.1} parent=1 // pred_fallthru
      _
    // Predicated region
    $region42: #{lif_forward.1} parent=1 // pred_check
      _
    $region43: #{lif_forward.1} parent=1 // pred_check_branch
      %105 = sbr.rel (0) target = $region45
    $region44: #{lif_forward.1} parent=1 // pred_region
      _
    $region45: #{lif_forward.1} parent=1 // pred_fallthru
      _
    // Predicated region
    $region46: #{lif_forward.1} parent=1 // pred_check
      _
    $region47: #{lif_forward.1} parent=1 // pred_check_branch
      %107 = sbr.rel (0) target = $region49
    $region48: #{lif_forward.1} parent=1 // pred_region
      _
    $region49: #{lif_forward.1} parent=1 // pred_fallthru
      _
    // Predicated region
    $region50: #{lif_forward.1} parent=1 // pred_check
      _
    $region51: #{lif_forward.1} parent=1 // pred_check_branch
      %109 = sbr.rel (0) target = $region53
    $region52: #{lif_forward.1} parent=1 // pred_region
      _
    $region53: #{lif_forward.1} parent=1 // pred_fallthru
      _
    // Predicated region
    $region54: #{lif_forward.1} parent=1 // pred_check
      _
    $region55: #{lif_forward.1} parent=1 // pred_check_branch
      %111 = sbr.rel (0) target = $region57
    $region56: #{lif_forward.1} parent=1 // pred_region
      _
    $region57: #{lif_forward.1} parent=1 // pred_fallthru
      _
    // Predicated region
    $region58: #{lif_forward.1} parent=1 // pred_check
      _
    $region59: #{lif_forward.1} parent=1 // pred_check_branch
      %113 = sbr.rel (0) target = $region61
    $region60: #{lif_forward.1} parent=1 // pred_region
      _
    $region61: #{lif_forward.1} parent=1 // pred_fallthru
      _
    %114 = vsyncpa [#allocation4], 1

</llo_original>
